<compile_context>
chip_gen: v7x
topology: tpu7x:2x2x1
jax: 0.10.0
libtpu: 0.0.40
codegen_flags: <defaults>
</compile_context>

<pallas_src>
import jax
import jax.numpy as jnp
from jax.experimental import pallas as pl
from jax.experimental.pallas import tpu as pltpu


LANE = 128      # TPU lane width
ROW_ALIGN = 16  # multiple of 16: satisfies bf16 (16,128) and f32 (8,128) tiling


def _round_up(x, m):
    return ((x + m - 1) // m) * m


def _linear_kernel(x_ref, wt_ref, b_ref, o_ref):
    # x_ref : (TM, n_hid)      VMEM (f32, cast to bf16 here - hidden under DMA)
    # wt_ref: (n_hid, C_pad)   VMEM (bf16, pre-transposed + lane-padded weight)
    # b_ref : (1, C_pad)       VMEM (f32, lane-padded bias)
    # o_ref : (TM, C_pad)      VMEM (bf16)
    x_bf16 = x_ref[...].astype(jnp.bfloat16)
    acc = jnp.dot(x_bf16, wt_ref[...], preferred_element_type=jnp.float32)
    o_ref[...] = (acc + b_ref[...]).astype(o_ref.dtype)


def prepare_fc_params(weight, bias, compute_dtype=jnp.bfloat16):
    """One-time prep of nn.Linear params for the kernel.

    weight: (n_class, n_hid), bias: (n_class,)
    Returns wt_pad (n_hid, C_pad) in compute_dtype and b_pad (1, C_pad) in f32,
    where C_pad = round_up(n_class, 128) for lane-dense output stores.
    """
    n_class, n_hid = weight.shape
    c_pad = _round_up(n_class, LANE)
    wt_pad = jnp.zeros((n_hid, c_pad), compute_dtype)
    wt_pad = wt_pad.at[:, :n_class].set(weight.T.astype(compute_dtype))
    b_pad = jnp.zeros((1, c_pad), jnp.float32)
    b_pad = b_pad.at[:, :n_class].set(bias.astype(jnp.float32))
    return wt_pad, b_pad


def hgnn_fc_forward(x, wt_pad, b_pad, n_class, tm_max=2048):
    """x: (N, n_hid) f32; wt_pad: (n_hid, C_pad) bf16; b_pad: (1, C_pad) f32."""
    n, n_hid = x.shape
    c_pad = wt_pad.shape[1]

    # Row tile: 16-aligned, capped by tm_max, and capped again so the row grid
    # has >= 2 steps whenever n allows it (v7x: 2 TensorCores; a 1-step grid
    # would leave one idle). Tiles stay tiny: x tile tm*n_hid*4 B, out tile
    # tm*c_pad*2 B -- far under the scoped-VMEM default even double-buffered.
    tm = min(tm_max, _round_up(n, ROW_ALIGN))
    if n > ROW_ALIGN:
        tm = min(tm, max(ROW_ALIGN, _round_up(pl.cdiv(n, 2), ROW_ALIGN)))
    tm = max(ROW_ALIGN, (tm // ROW_ALIGN) * ROW_ALIGN)

    grid = (pl.cdiv(n, tm),)  # partial final block; no wrapper-side jnp.pad

    out = pl.pallas_call(
        _linear_kernel,
        out_shape=jax.ShapeDtypeStruct((n, c_pad), jnp.bfloat16),
        grid_spec=pltpu.PrefetchScalarGridSpec(
            num_scalar_prefetch=0,
            grid=grid,
            in_specs=[
                pl.BlockSpec((tm, n_hid), lambda i: (i, 0)),      # x row tile (f32)
                # Resident operands (constant index map). NOTE: once this head
                # is fused with a large propagation matmul, mark these
                # pipeline_mode=pl.Buffered(1) so they don't hold a pointless
                # second buffer; here they are ~8 KiB so it is irrelevant.
                pl.BlockSpec((n_hid, c_pad), lambda i: (0, 0)),   # weight (resident)
                pl.BlockSpec((1, c_pad), lambda i: (0, 0)),       # bias (resident)
            ],
            out_specs=pl.BlockSpec((tm, c_pad), lambda i: (i, 0)),
        ),
        compiler_params=pltpu.CompilerParams(
            dimension_semantics=("parallel",)),  # independent row tiles (2 TCs on v7x)
    )(x, wt_pad, b_pad)

    # Drop the lane padding of the class dimension; cheap (n x n_class) cast
    # back to the caller's dtype.
    return out[:, :n_class].astype(x.dtype)


# TODO(synk): at these toy sizes a standalone Linear is launch/HBM bound (and
# n_hid=32 leaves x vregs only 25% lane-utilized); in a full HGNN this head
# should be fused with the preceding G @ X @ Theta propagation (whose output
# already sits lane-dense in VMEM) rather than run as its own pallas_call.


if __name__ == "__main__":
    # Small shapes consistent with HGNN_fc: in_ch=32, out_ch=16. n=200 gives a
    # 2-step row grid (tm=112) with a partial final block, exercising both the
    # >=2-step v7x path and edge-block masking.
    n, n_hid, n_class = 200, 32, 16

    key = jax.random.PRNGKey(0)
    kx, kw, kb = jax.random.split(key, 3)

    x = jax.random.normal(kx, (n, n_hid), dtype=jnp.float32)
    # nn.Linear-style uniform init.
    bound = 1.0 / (n_hid ** 0.5)
    weight = jax.random.uniform(kw, (n_class, n_hid), jnp.float32, -bound, bound)
    bias = jax.random.uniform(kb, (n_class,), jnp.float32, -bound, bound)

    # One-time parameter prep (transpose + lane padding + bf16 cast).
    wt_pad, b_pad = prepare_fc_params(weight, bias, compute_dtype=jnp.bfloat16)

    y = hgnn_fc_forward(x, wt_pad, b_pad, n_class)
    jax.block_until_ready(y)
    assert y.shape == (n, n_class)

    # Reference with the same bf16 rounding of the matmul inputs, f32 math.
    # The kernel additionally rounds the stored output to bf16, so the
    # tolerance is loosened to cover one bf16 ulp of the result.
    x_r = x.astype(jnp.bfloat16).astype(jnp.float32)
    w_r = weight.astype(jnp.bfloat16).astype(jnp.float32)
    y_ref = x_r @ w_r.T + bias
    assert jnp.allclose(y, y_ref, atol=2e-2, rtol=2e-2)

    # Sanity check against the full-precision reference (bf16 input + output
    # rounding only introduces a few-percent error for this head).
    y_ref_f32 = x @ weight.T + bias
    assert jnp.allclose(y, y_ref_f32, atol=5e-2, rtol=5e-2)

    print("KERNEL_OK")
</pallas_src>

<mosaic_0001>
module attributes {stable_mosaic.version = 11 : i64} {
  func.func @_linear_kernel(%arg0: i32, %arg1: memref<112x32xf32, #tpu.memory_space<vmem>>, %arg2: memref<32x128xbf16, #tpu.memory_space<vmem>>, %arg3: memref<1x128xf32, #tpu.memory_space<vmem>>, %arg4: memref<112x128xbf16, #tpu.memory_space<vmem>>) attributes {dimension_semantics = [#tpu.dimension_semantics<parallel>], iteration_bounds = array<i64: 2>, scalar_prefetch = 0 : i64, scratch_operands = 0 : i64, tpu.core_type = #tpu.core_type<tc>, window_params = [{transform_indices = @transform_0, window_bounds = array<i64: 112, 32>}, {pipeline_mode = #tpu.pipeline_mode<synchronous>, transform_indices = @transform_1, window_bounds = array<i64: 32, 128>}, {pipeline_mode = #tpu.pipeline_mode<synchronous>, transform_indices = @transform_2, window_bounds = array<i64: 1, 128>}, {transform_indices = @transform_3, window_bounds = array<i64: 112, 128>}]} {
    %c0 = arith.constant 0 : index
    %c0_0 = arith.constant 0 : index
    %0 = vector.load %arg1[%c0, %c0_0] : memref<112x32xf32, #tpu.memory_space<vmem>>, vector<112x32xf32>
    %1 = arith.truncf %0 : vector<112x32xf32> to vector<112x32xbf16>
    %c0_1 = arith.constant 0 : index
    %c0_2 = arith.constant 0 : index
    %2 = vector.load %arg2[%c0_1, %c0_2] : memref<32x128xbf16, #tpu.memory_space<vmem>>, vector<32x128xbf16>
    %cst = arith.constant dense<0.000000e+00> : vector<112x128xf32>
    %3 = tpu.matmul %1, %2, %cst {dimension_numbers = #tpu.dot_dimension_numbers<[1], [0], [0], [1], [0, 0, 1, 1], [], []>} : vector<112x32xbf16>, vector<32x128xbf16>, vector<112x128xf32> -> vector<112x128xf32>
    %c0_3 = arith.constant 0 : index
    %c0_4 = arith.constant 0 : index
    %4 = vector.load %arg3[%c0_3, %c0_4] : memref<1x128xf32, #tpu.memory_space<vmem>>, vector<1x128xf32>
    %5 = vector.broadcast %4 : vector<1x128xf32> to vector<112x128xf32>
    %6 = arith.addf %3, %5 : vector<112x128xf32>
    %7 = arith.truncf %6 : vector<112x128xf32> to vector<112x128xbf16>
    %c0_5 = arith.constant 0 : index
    %c0_6 = arith.constant 0 : index
    %8 = vector.load %arg4[%c0_5, %c0_6] : memref<112x128xbf16, #tpu.memory_space<vmem>>, vector<112x128xbf16>
    tpu.vector_store %arg4[%c0_5, %c0_6], %7 {strides = array<i32>} : memref<112x128xbf16, #tpu.memory_space<vmem>>, vector<112x128xbf16>,
    return
  }
  func.func @transform_0(%arg0: i32) -> (i32, i32) {
    %c0_i32 = arith.constant 0 : i32
    %c0_i32_0 = arith.constant 0 : i32
    return %arg0, %c0_i32 : i32, i32
  }
  func.func @transform_1(%arg0: i32) -> (i32, i32) {
    %c0_i32 = arith.constant 0 : i32
    %c0_i32_0 = arith.constant 0 : i32
    %c0_i32_1 = arith.constant 0 : i32
    return %c0_i32, %c0_i32_0 : i32, i32
  }
  func.func @transform_2(%arg0: i32) -> (i32, i32) {
    %c0_i32 = arith.constant 0 : i32
    %c0_i32_0 = arith.constant 0 : i32
    %c0_i32_1 = arith.constant 0 : i32
    return %c0_i32, %c0_i32_0 : i32, i32
  }
  func.func @transform_3(%arg0: i32) -> (i32, i32) {
    %c0_i32 = arith.constant 0 : i32
    %c0_i32_0 = arith.constant 0 : i32
    return %arg0, %c0_i32 : i32, i32
  }
}

</mosaic_0001>

<llo_original>
// kernel: tpu_custom_call.1
$region0: #{tpu_custom_call.1}
  #allocation0 [shape = 'u32[]', space=smem, size = 0x4, offset = 0x4, fixed_abs, tag = 'smem constant byte address 0x4 - core index']
  #allocation1 [shape = 'u32[144,128]{1,0:T(1,128)}', space=vmem, size = 0x12000, scoped, tag = 'internal scratch']
  %s0 = inlined_call_operand.vmem [shape: f32[200,32], index: 0, kind: input, shape index: {}]
  %s1 = inlined_call_operand.vmem [shape: bf16[32,128], index: 1, kind: input, shape index: {}]
  %s2 = inlined_call_operand.vmem [shape: f32[1,128], index: 2, kind: input, shape index: {}]
  %s3 = inlined_call_operand.hbm [shape: bf16[200,128], index: 3, kind: output, shape index: {}]
  %s4 = sld [smem:[#allocation0]]
  $region45: #{tpu_custom_call.1} parent=0
    _
  %s6 = ssub.s32 1, %s4
  %s7 = scalar_select 0, %s6, %s4
  $region1: #{tpu_custom_call.1} parent=0
    #allocation2 [shape = 'u8[57344]{0}', space=vmem, size = 0xe000, scoped, tag = 'output window, operand 0']
    #allocation3 [shape = 's32[2]{0}', space=sflag, size = 0x8, scoped, tag = 'scoped memory for tpu_custom_call.1']
    %8 = vsyncpa [#allocation3], 0
    %s9 = scalar_lea.sflag [#allocation3], 1
    %10 = vsyncpa %s9, 0
    loop: start=0, step=1, limit=4
    $region2: #{tpu_custom_call.1} parent=1 // loop_pre_header
      _
    $region3: #{tpu_custom_call.1} parent=1 // loop_header
      %s12 = sphi 0, %s16
      %p13 = scmp.ge.s32.totalorder %s12, 4
      %s22 = sphi 0, %s24
      %s25 = sphi 0, %s22
      %s26 = sphi 0, %s25
      %s42 = sphi 0, %s26
      %s46 = sphi 0, %s46
      %s48 = sphi 0, %s46
      %s49 = sphi 0, %s48
      %s63 = sphi 0, %s49
      %s67 = sphi 0, %s67
      %s69 = sphi 0, %s67
      %s70 = sphi 0, %s69
      %s84 = sphi 0, %s70
      %s90 = sphi 0, %s92
      %s93 = sphi 0, %s90
      %s94 = sphi 0, %s93
      %s110 = sphi 0, %s94
    $region4: #{tpu_custom_call.1} parent=1 // loop_header_branch
      %15 = sbr.rel (%p13) target = $region8
    $region5: #{tpu_custom_call.1} parent=1 // loop_body
      %s17 = ssub.s32 %s12, 1
      %s18 = ssub.s32 %s12, 2
      %s19 = sadd.s32 %s12, 1
      %s20 = ssub.s32 %s12, %s19
      %p21 = scmp.eq.s32.totalorder %s20, 0
      %s23 = sadd.s32 %s22, 1
      %s24 = scalar_select %p21, %s22, %s23
      %p27 = pneg %p21
      %p28 = scmp.eq.s32.totalorder %s12, 1
      %p29 = por %p27, %p28
      %p30 = scmp.ne.s32.totalorder %s22, %s25
      %p31 = scmp.eq.s32.totalorder %s12, 0
      %p32 = por %p30, %p31
      %p33 = scmp.ne.s32.totalorder %s22, %s25
      %p34 = scmp.eq.s32.totalorder %s17, 1
      %p35 = por %p33, %p34
      %p36 = scmp.ne.s32.totalorder %s25, %s26
      %p37 = scmp.eq.s32.totalorder %s17, 0
      %p38 = por %p36, %p37
      %p39 = scmp.ne.s32.totalorder %s25, %s26
      %p40 = scmp.eq.s32.totalorder %s18, 1
      %p41 = por %p39, %p40
      %p43 = scmp.ne.s32.totalorder %s26, %s42
      %p44 = scmp.eq.s32.totalorder %s18, 0
      %p45 = por %p43, %p44
      %s47 = sadd.s32 %s46, 1
      %p50 = scmp.eq.s32.totalorder %s12, 1
      %p51 = scmp.ne.s32.totalorder %s46, %s48
      %p52 = scmp.eq.s32.totalorder %s12, 0
      %p53 = por %p51, %p52
      %p54 = scmp.ne.s32.totalorder %s46, %s48
      %p55 = scmp.eq.s32.totalorder %s17, 1
      %p56 = por %p54, %p55
      %p57 = scmp.ne.s32.totalorder %s48, %s49
      %p58 = scmp.eq.s32.totalorder %s17, 0
      %p59 = por %p57, %p58
      %p60 = scmp.ne.s32.totalorder %s48, %s49
      %p61 = scmp.eq.s32.totalorder %s18, 1
      %p62 = por %p60, %p61
      %p64 = scmp.ne.s32.totalorder %s49, %s63
      %p65 = scmp.eq.s32.totalorder %s18, 0
      %p66 = por %p64, %p65
      %s68 = sadd.s32 %s67, 1
      %p71 = scmp.eq.s32.totalorder %s12, 1
      %p72 = scmp.ne.s32.totalorder %s67, %s69
      %p73 = scmp.eq.s32.totalorder %s12, 0
      %p74 = por %p72, %p73
      %p75 = scmp.ne.s32.totalorder %s67, %s69
      %p76 = scmp.eq.s32.totalorder %s17, 1
      %p77 = por %p75, %p76
      %p78 = scmp.ne.s32.totalorder %s69, %s70
      %p79 = scmp.eq.s32.totalorder %s17, 0
      %p80 = por %p78, %p79
      %p81 = scmp.ne.s32.totalorder %s69, %s70
      %p82 = scmp.eq.s32.totalorder %s18, 1
      %p83 = por %p81, %p82
      %p85 = scmp.ne.s32.totalorder %s70, %s84
      %p86 = scmp.eq.s32.totalorder %s18, 0
      %p87 = por %p85, %p86
      %s88 = ssub.s32 %s12, %s19
      %p89 = scmp.eq.s32.totalorder %s88, 0
      %s91 = sadd.s32 %s90, 1
      %s92 = scalar_select %p89, %s90, %s91
      %p95 = pneg %p89
      %p96 = scmp.eq.s32.totalorder %s12, 1
      %p97 = por %p95, %p96
      %p98 = scmp.ne.s32.totalorder %s90, %s93
      %p99 = scmp.eq.s32.totalorder %s12, 0
      %p100 = por %p98, %p99
      %p101 = scmp.ne.s32.totalorder %s90, %s93
      %p102 = scmp.eq.s32.totalorder %s17, 1
      %p103 = por %p101, %p102
      %p104 = scmp.ne.s32.totalorder %s93, %s94
      %p105 = scmp.eq.s32.totalorder %s17, 0
      %p106 = por %p104, %p105
      %p107 = scmp.ne.s32.totalorder %s93, %s94
      %p108 = scmp.eq.s32.totalorder %s18, 1
      %p109 = por %p107, %p108
      %p111 = scmp.ne.s32.totalorder %s94, %s110
      %p112 = scmp.eq.s32.totalorder %s18, 0
      %p113 = por %p111, %p112
      %p114 = scmp.le.s32.totalorder 1, %s12
      %p115 = scmp.lt.s32.totalorder %s12, 3
      %p116 = pnand %p114, %p115
      %p117 = pneg %p116
      // Predicated region
      $region9: #{tpu_custom_call.1} parent=5 // pred_check
        _
      $region10: #{tpu_custom_call.1} parent=5 // pred_check_branch
        %119 = sbr.rel (%p116) target = $region12
      $region11: #{tpu_custom_call.1} parent=5 // pred_region
        %s120 = ssub.s32 %s12, 1
        // Predicated region
        $region13: #{tpu_custom_call.1} parent=11 // pred_check
          %p121 = pneg %p59
        $region14: #{tpu_custom_call.1} parent=11 // pred_check_branch
          %123 = sbr.rel (%p121) target = $region16
        $region15: #{tpu_custom_call.1} parent=11 // pred_region
          _
        $region16: #{tpu_custom_call.1} parent=11 // pred_fallthru
          _
        // Predicated region
        $region17: #{tpu_custom_call.1} parent=11 // pred_check
          %p124 = pneg %p80
        $region18: #{tpu_custom_call.1} parent=11 // pred_check_branch
          %126 = sbr.rel (%p124) target = $region20
        $region19: #{tpu_custom_call.1} parent=11 // pred_region
          _
        $region20: #{tpu_custom_call.1} parent=11 // pred_fallthru
          _
      $region12: #{tpu_custom_call.1} parent=5 // pred_fallthru
        _
      %p127 = scmp.lt.s32.totalorder %s12, 2
      // Predicated region
      $region21: #{tpu_custom_call.1} parent=5 // pred_check
        %p128 = pneg %p127
      $region22: #{tpu_custom_call.1} parent=5 // pred_check_branch
        %130 = sbr.rel (%p128) target = $region24
      $region23: #{tpu_custom_call.1} parent=5 // pred_region
        // Predicated region
        $region25: #{tpu_custom_call.1} parent=23 // pred_check
          %p131 = pneg %p32
        $region26: #{tpu_custom_call.1} parent=23 // pred_check_branch
          %133 = sbr.rel (%p131) target = $region28
        $region27: #{tpu_custom_call.1} parent=23 // pred_region
          %s134 = smul.u32 14, %s12
          %s135 = ssub.s32 25, %s134
          %p136 = scmp.lt.s32.totalorder %s135, 14
          %s137 = scalar_select %p136, %s135, 14
          %s138 = smul.u32 128, %s137
          %p139 = scmp.lt.s32.totalorder %s134, 24
          %s140 = scalar_select %p139, %s134, 24
          %s141 = smul.addr %s140, 8
          %s142 = scalar_lea.vmem %s0, %s141
          %s143 = smul.u32 14, %s12
          %s144 = ssub.s32 25, %s143
          %p145 = scmp.lt.s32.totalorder %s144, 14
          %s146 = scalar_select %p145, %s144, 14
          %s147 = smul.u32 128, %s146
        $region28: #{tpu_custom_call.1} parent=23 // pred_fallthru
          _
      $region24: #{tpu_custom_call.1} parent=5 // pred_fallthru
        _
      %p148 = scmp.le.s32.totalorder 1, %s12
      %p149 = scmp.lt.s32.totalorder %s12, 3
      %p150 = pnand %p148, %p149
      %p151 = pneg %p150
      // Predicated region
      $region29: #{tpu_custom_call.1} parent=5 // pred_check
        _
      $region30: #{tpu_custom_call.1} parent=5 // pred_check_branch
        %153 = sbr.rel (%p150) target = $region32
      $region31: #{tpu_custom_call.1} parent=5 // pred_region
        %s154 = ssub.s32 %s12, 1
        %s155 = smul.u32 14, %s17
        %s156 = ssub.s32 25, %s155
        %p157 = scmp.lt.s32.totalorder %s156, 14
        %s158 = scalar_select %p157, %s156, 14
        %s159 = smul.u32 128, %s158
        %p160 = scmp.lt.s32.totalorder %s155, 24
        %s161 = scalar_select %p160, %s155, 24
        %s162 = smul.addr %s161, 8
        %s163 = scalar_lea.vmem %s0, %s162
        %p164 = pneg %p38
        %p165 = pneg %p35
        %p166 = pneg %p59
        %p167 = pneg %p56
        %p168 = pneg %p80
        %p169 = pneg %p77
        %p170 = pneg %p106
        %p171 = pneg %p103
        %s172 = sand.u32 %s93, 1
        %s173 = scalar_lea.sflag [#allocation3], %s172
        %s174 = sand.u32 %s93, 1
        %s175 = smul.addr %s174, 56
        %s176 = scalar_lea.vmem [#allocation2], %s175
        %s177 = smul.u32 14, %s17
        %s178 = ssub.s32 25, %s177
        %p179 = scmp.lt.s32.totalorder %s178, 14
        %s180 = scalar_select %p179, %s178, 14
        %s181 = smul.u32 128, %s180
        %p182 = scmp.lt.s32.totalorder %s177, 24
        %s183 = scalar_select %p182, %s177, 24
        %s184 = smul.addr %s183, 8
        %s185 = scalar_lea.vmem %s0, %s184
        %s186 = smul.u32 14, %s17
        %s187 = ssub.s32 25, %s186
        %p188 = scmp.lt.s32.totalorder %s187, 14
        %s189 = scalar_select %p188, %s187, 14
        %s190 = smul.u32 128, %s189
        %s191 = smul.u32 14, %s17
        %s192 = ssub.s32 25, %s191
        %p193 = scmp.lt.s32.totalorder %s192, 14
        %s194 = scalar_select %p193, %s192, 14
        %s195 = smul.u32 64, %s194
        %v197 = vld [vmem:[%s185] sm:$0xff]
        %v198 = vld [vmem:[%s185 + $0x8] sm:$0xff]
        %v199 = vld [vmem:[%s185 + $0x10] sm:$0xff]
        %v200 = vld [vmem:[%s185 + $0x18] sm:$0xff]
        %v201 = vld [vmem:[%s185 + $0x20] sm:$0xff]
        %v202 = vld [vmem:[%s185 + $0x28] sm:$0xff]
        %v203 = vld [vmem:[%s185 + $0x30] sm:$0xff]
        %v204 = vld [vmem:[%s185 + $0x38] sm:$0xff]
        %v205 = vld [vmem:[%s185 + $0x40] sm:$0xff]
        %v206 = vld [vmem:[%s185 + $0x48] sm:$0xff]
        %v207 = vld [vmem:[%s185 + $0x50] sm:$0xff]
        %v208 = vld [vmem:[%s185 + $0x58] sm:$0xff]
        %v209 = vld [vmem:[%s185 + $0x60] sm:$0xff]
        %v210 = vld [vmem:[%s185 + $0x68] sm:$0xff]
        %v211 = vpack.c.bf16 %v198, %v197
        %v212 = vpack.c.bf16 %v200, %v199
        %v213 = vpack.c.bf16 %v202, %v201
        %v214 = vpack.c.bf16 %v204, %v203
        %v215 = vpack.c.bf16 %v206, %v205
        %v216 = vpack.c.bf16 %v208, %v207
        %v217 = vpack.c.bf16 %v210, %v209
        %v218 = vld [vmem:[%s1] sm:$0xf]
        %v219 = vld [vmem:[%s1 + $0x4] sm:$0xf]
        %v220 = vld [vmem:[%s1 + $0x8] sm:$0xf]
        %v221 = vld [vmem:[%s1 + $0xc] sm:$0xf]
        %v222 = vld [vmem:[%s2] sm:$0x1]
        %v224 = vlaneseq
        %v225 = vshrl.u32 %v224, 7
        %v226 = vsub.s32 0, %v225
        %v227 = vrot.slane %v222, %v226
        %v233 = vunpack.c.l.b16 %v218
        %v234 = vunpack.c.l.b16 %v219
        %v235 = vunpack.c.l.b16 %v220
        %v236 = vunpack.c.l.b16 %v221
        %v237 = vpack.c.b16 %v234, %v233
        %v238 = vpack.c.b16 %v236, %v235
        %vm241 = vcmask 261120
        %v243 = vsel %vm241, %v211, 0
        %v246 = vsel %vm241, %v212, 0
        %v249 = vsel %vm241, %v213, 0
        %v252 = vsel %vm241, %v214, 0
        %v255 = vsel %vm241, %v215, 0
        %v258 = vsel %vm241, %v216, 0
        %v261 = vsel %vm241, %v217, 0
        %263 = vmatprep.subr.bf16.mxu0 0
        %264 = vmatpush1.bf16.msra.mxu0 %v237
        %265 = vmatprep.subr.bf16.mxu0 0
        %266 = vmatpush1.bf16.msra.mxu0 %v238
        %267 = vmatprep.subr.bf16.mxu0 0
        %268 = vmatpush1.bf16.msra.mxu0 0
        %269 = vmatprep.subr.bf16.mxu0 0
        %270 = vmatpush1.bf16.msra.mxu0 0
        %271 = vmatprep.subr.bf16.mxu0 0
        %272 = vmatpush1.bf16.msra.mxu0 0
        %273 = vmatprep.subr.bf16.mxu0 0
        %274 = vmatpush1.bf16.msra.mxu0 0
        %275 = vmatprep.subr.bf16.mxu0 0
        %276 = vmatpush1.bf16.msra.mxu0 0
        %277 = vmatprep.subr.bf16.mxu0 0
        %278 = vmatpush1.bf16.msra.mxu0 0
        %279 = vmatprep.subr.bf16.mxu0 0
        %280 = vmatpush1.bf16.msra.mxu0 0
        %281 = vmatprep.subr.bf16.mxu0 0
        %282 = vmatpush1.bf16.msra.mxu0 0
        %283 = vmatprep.subr.bf16.mxu0 0
        %284 = vmatpush1.bf16.msra.mxu0 0
        %285 = vmatprep.subr.bf16.mxu0 0
        %286 = vmatpush1.bf16.msra.mxu0 0
        %287 = vmatprep.subr.bf16.mxu0 0
        %288 = vmatpush1.bf16.msra.mxu0 0
        %289 = vmatprep.subr.bf16.mxu0 0
        %290 = vmatpush1.bf16.msra.mxu0 0
        %291 = vmatprep.subr.bf16.mxu0 0
        %292 = vmatpush1.bf16.msra.mxu0 0
        %293 = vmatprep.subr.bf16.mxu0 0
        %294 = vmatpush1.bf16.msra.mxu0 0
        %295 = vmatprep.mubr.bf16.mxu0 0
        %296 = vmatmul.mubr.bf16.gmra.mrb[0].mxu0 %v243
        %v297 = vpop.f32.mrb[0].mxu0
        %v298 = vadd.f32 %v227, %v297
        %v299 = vpop.f32.mrb[0].mxu0
        %v300 = vpop.f32.mrb[0].mxu0
        %v301 = vadd.f32 %v227, %v300
        %v302 = vpop.f32.mrb[0].mxu0
        %303 = vmatprep.mubr.bf16.mxu0 0
        %304 = vmatmul.mubr.bf16.gmra.mrb[0].mxu0 %v246
        %v305 = vpop.f32.mrb[0].mxu0
        %v306 = vadd.f32 %v227, %v305
        %v307 = vpop.f32.mrb[0].mxu0
        %v308 = vpop.f32.mrb[0].mxu0
        %v309 = vadd.f32 %v227, %v308
        %v310 = vpop.f32.mrb[0].mxu0
        %311 = vmatprep.mubr.bf16.mxu0 0
        %312 = vmatmul.mubr.bf16.gmra.mrb[0].mxu0 %v249
        %v313 = vpop.f32.mrb[0].mxu0
        %v314 = vadd.f32 %v227, %v313
        %v315 = vpop.f32.mrb[0].mxu0
        %v316 = vpop.f32.mrb[0].mxu0
        %v317 = vadd.f32 %v227, %v316
        %v318 = vpop.f32.mrb[0].mxu0
        %319 = vmatprep.mubr.bf16.mxu0 0
        %320 = vmatmul.mubr.bf16.gmra.mrb[0].mxu0 %v252
        %v321 = vpop.f32.mrb[0].mxu0
        %v322 = vadd.f32 %v227, %v321
        %v323 = vpop.f32.mrb[0].mxu0
        %v324 = vpop.f32.mrb[0].mxu0
        %v325 = vadd.f32 %v227, %v324
        %v326 = vpop.f32.mrb[0].mxu0
        %327 = vmatprep.mubr.bf16.mxu0 0
        %328 = vmatmul.mubr.bf16.gmra.mrb[0].mxu0 %v255
        %v329 = vpop.f32.mrb[0].mxu0
        %v330 = vadd.f32 %v227, %v329
        %v331 = vpop.f32.mrb[0].mxu0
        %v332 = vpop.f32.mrb[0].mxu0
        %v333 = vadd.f32 %v227, %v332
        %v334 = vpop.f32.mrb[0].mxu0
        %335 = vmatprep.mubr.bf16.mxu0 0
        %336 = vmatmul.mubr.bf16.gmra.mrb[0].mxu0 %v258
        %v337 = vpop.f32.mrb[0].mxu0
        %v338 = vadd.f32 %v227, %v337
        %v339 = vpop.f32.mrb[0].mxu0
        %v340 = vpop.f32.mrb[0].mxu0
        %v341 = vadd.f32 %v227, %v340
        %v342 = vpop.f32.mrb[0].mxu0
        %343 = vmatprep.mubr.bf16.mxu0 0
        %344 = vmatmul.mubr.bf16.gmra.mrb[0].mxu0 %v261
        %v345 = vpop.f32.mrb[0].mxu0
        %v346 = vadd.f32 %v227, %v345
        %v347 = vpop.f32.mrb[0].mxu0
        %v348 = vpop.f32.mrb[0].mxu0
        %v349 = vadd.f32 %v227, %v348
        %v350 = vpop.f32.mrb[0].mxu0
        %351 = vdwg.mxu0
        %v352 = vpack.c.bf16 %v301, %v298
        %v353 = vpack.c.bf16 %v309, %v306
        %v354 = vpack.c.bf16 %v317, %v314
        %v355 = vpack.c.bf16 %v325, %v322
        %v356 = vpack.c.bf16 %v333, %v330
        %v357 = vpack.c.bf16 %v341, %v338
        %v358 = vpack.c.bf16 %v349, %v346
        %v366 = vunpack.c.l.b16 %v352
        %v367 = vunpack.c.h.b16 %v352
        %v368 = vunpack.c.l.b16 %v353
        %v369 = vunpack.c.h.b16 %v353
        %v370 = vunpack.c.l.b16 %v354
        %v371 = vunpack.c.h.b16 %v354
        %v372 = vunpack.c.l.b16 %v355
        %v373 = vunpack.c.h.b16 %v355
        %v374 = vunpack.c.l.b16 %v356
        %v375 = vunpack.c.h.b16 %v356
        %v376 = vunpack.c.l.b16 %v357
        %v377 = vunpack.c.h.b16 %v357
        %v378 = vunpack.c.l.b16 %v358
        %v379 = vunpack.c.h.b16 %v358
        %v380 = vpack.c.b16 %v366, %v366
        %v381 = vpack.c.b16 %v367, %v367
        %v382 = vpack.c.b16 %v368, %v368
        %v383 = vpack.c.b16 %v369, %v369
        %v384 = vpack.c.b16 %v370, %v370
        %v385 = vpack.c.b16 %v371, %v371
        %v386 = vpack.c.b16 %v372, %v372
        %v387 = vpack.c.b16 %v373, %v373
        %v388 = vpack.c.b16 %v374, %v374
        %v389 = vpack.c.b16 %v375, %v375
        %v390 = vpack.c.b16 %v376, %v376
        %v391 = vpack.c.b16 %v377, %v377
        %v392 = vpack.c.b16 %v378, %v378
        %v393 = vpack.c.b16 %v379, %v379
        %408 = vst [vmem:[%s176] sm:$0xf] %v380
        %409 = vst [vmem:[%s176 + $0x4] sm:$0xf] %v381
        %410 = vst [vmem:[%s176 + $0x8] sm:$0xf] %v382
        %411 = vst [vmem:[%s176 + $0xc] sm:$0xf] %v383
        %412 = vst [vmem:[%s176 + $0x10] sm:$0xf] %v384
        %413 = vst [vmem:[%s176 + $0x14] sm:$0xf] %v385
        %414 = vst [vmem:[%s176 + $0x18] sm:$0xf] %v386
        %415 = vst [vmem:[%s176 + $0x1c] sm:$0xf] %v387
        %416 = vst [vmem:[%s176 + $0x20] sm:$0xf] %v388
        %417 = vst [vmem:[%s176 + $0x24] sm:$0xf] %v389
        %418 = vst [vmem:[%s176 + $0x28] sm:$0xf] %v390
        %419 = vst [vmem:[%s176 + $0x2c] sm:$0xf] %v391
        %420 = vst [vmem:[%s176 + $0x30] sm:$0xf] %v392
        %421 = vst [vmem:[%s176 + $0x34] sm:$0xf] %v393
        %s422 = sand.u32 %s93, 1
        %s423 = scalar_lea.sflag [#allocation3], %s422
        %s424 = sand.u32 %s93, 1
        %s425 = smul.addr %s424, 56
        %s426 = scalar_lea.vmem [#allocation2], %s425
        // Predicated region
        $region33: #{tpu_custom_call.1} parent=31 // pred_check
          %p427 = pneg %p103
        $region34: #{tpu_custom_call.1} parent=31 // pred_check_branch
          %429 = sbr.rel (%p427) target = $region36
        $region35: #{tpu_custom_call.1} parent=31 // pred_region
          %s430 = smul.u32 14, %s17
          %s431 = ssub.s32 25, %s430
          %p432 = scmp.lt.s32.totalorder %s431, 14
          %s433 = scalar_select %p432, %s431, 14
          %s434 = smul.u32 64, %s433
          %s436 = ssub.s32 896, %s434
          %437 = vsyncadd %s423, %s436
          %p438 = scmp.ne.s32.totalorder 0, %s434
          %s439 = smul.addr %s430, 64
          %s440 = scalar_lea.hbm %s3, %s439
          %s441 = smul.u32 4, %s433
          %s442 = sshll.u32 %s426, 4
          %s443 = int_to_ptr.vmem [resolvable:$true] %s442
          %s444 = sshll.u32 %s441, 4
          %448 = dma.vmem_to_hbm [thread:$0]  (%p438), %s443, %s444, %s440, %s423, 64, 64, 4
        $region36: #{tpu_custom_call.1} parent=31 // pred_fallthru
          _
      $region32: #{tpu_custom_call.1} parent=5 // pred_fallthru
        _
      %p449 = scmp.le.s32.totalorder 2, %s12
      // Predicated region
      $region37: #{tpu_custom_call.1} parent=5 // pred_check
        %p450 = pneg %p449
      $region38: #{tpu_custom_call.1} parent=5 // pred_check_branch
        %452 = sbr.rel (%p450) target = $region40
      $region39: #{tpu_custom_call.1} parent=5 // pred_region
        %s453 = ssub.s32 %s12, 2
        // Predicated region
        $region41: #{tpu_custom_call.1} parent=39 // pred_check
          %p454 = pneg %p109
        $region42: #{tpu_custom_call.1} parent=39 // pred_check_branch
          %456 = sbr.rel (%p454) target = $region44
        $region43: #{tpu_custom_call.1} parent=39 // pred_region
          %s457 = sand.u32 %s94, 1
          %s458 = scalar_lea.sflag [#allocation3], %s457
          %s459 = sand.u32 %s94, 1
          %s460 = smul.addr %s459, 56
          %s461 = scalar_lea.vmem [#allocation2], %s460
          %462 = dma.done %s458, 896
        $region44: #{tpu_custom_call.1} parent=39 // pred_fallthru
          _
      $region40: #{tpu_custom_call.1} parent=5 // pred_fallthru
        _
    $region6: #{tpu_custom_call.1} parent=1 // loop_footer
      %s16 = sadd.s32 1, %s12
    $region7: #{tpu_custom_call.1} parent=1 // loop_footer_branch
      %11 = sbr.rel target = $region3
    $region8: #{tpu_custom_call.1} parent=1 // loop_exit
      _
    %463 = vsyncpa [#allocation3], 1
    %s464 = scalar_lea.sflag [#allocation3], 1
    %465 = vsyncpa %s464, 1

</llo_original>
